<compile_context>
chip_gen: v7x
topology: tpu7x:2x2x1
jax: 0.10.0
libtpu: 0.0.40
codegen_flags: <defaults>
</compile_context>

<pallas_src>
from functools import partial

import jax
import jax.numpy as jnp
from jax.experimental import pallas as pl
from jax.experimental.pallas import tpu as pltpu


# ----------------------------- Pallas kernel --------------------------------

def _adain_kernel(x_ref, w_ref, b_ref, o_ref, *, eps):
    """Per-row instance norm + affine.

    x_ref : (TM, HW) f32   -- TM (batch*channel) rows, full spatial extent
    w_ref : (TM, 1)  f32   -- per-row scale
    b_ref : (TM, 1)  f32   -- per-row shift
    """
    x = x_ref[...]
    mean = jnp.mean(x, axis=-1, keepdims=True)           # (TM, 1)
    xc = x - mean
    var = jnp.mean(xc * xc, axis=-1, keepdims=True)      # biased variance
    inv = jax.lax.rsqrt(var + eps)                       # EUP rsqrt (free slot)
    o_ref[...] = xc * (inv * w_ref[...]) + b_ref[...]


# ------------------------------- wrapper -------------------------------------

def adaptive_instance_norm_2d(x, weight, bias, eps=1e-5):
    """x: (B, C, H, W).  weight, bias: (B*C,) AdaIN params assigned externally."""
    B, C, H, W = x.shape
    BC, HW = B * C, H * W

    # Pure reshapes (no transpose): NCHW is already (B*C, H*W)-contiguous.
    x2 = x.reshape(BC, HW).astype(jnp.float32)
    w2 = weight.reshape(BC, 1).astype(jnp.float32)
    b2 = bias.reshape(BC, 1).astype(jnp.float32)

    # --- row-tile sizing ------------------------------------------------------
    # Each grid step holds a (TM, HW) f32 input tile + output tile, double
    # buffered by the BlockSpec pipeline.  Cap the input tile at ~4 MiB so
    # 2 bufs x (in + out) stays far below v7x's 32 MiB scoped VMEM.
    # TODO(synk): for H*W too large for a single VMEM tile, a two-pass
    # (stats then normalize) reduction over a spatial grid axis would be needed.
    row_bytes = HW * 4
    tm_cap = max(8, (4 * 1024 * 1024 // row_bytes) // 8 * 8)
    TM = min(tm_cap, ((BC + 7) // 8) * 8)

    BC_pad = ((BC + TM - 1) // TM) * TM
    if BC_pad != BC:
        pad = BC_pad - BC
        x2 = jnp.pad(x2, ((0, pad), (0, 0)))
        w2 = jnp.pad(w2, ((0, pad), (0, 0)))
        b2 = jnp.pad(b2, ((0, pad), (0, 0)))

    grid = (BC_pad // TM,)

    out = pl.pallas_call(
        partial(_adain_kernel, eps=eps),
        out_shape=jax.ShapeDtypeStruct((BC_pad, HW), jnp.float32),
        grid_spec=pltpu.PrefetchScalarGridSpec(
            num_scalar_prefetch=0,
            grid=grid,
            in_specs=[
                pl.BlockSpec((TM, HW), lambda i: (i, 0)),
                pl.BlockSpec((TM, 1), lambda i: (i, 0)),
                pl.BlockSpec((TM, 1), lambda i: (i, 0)),
            ],
            out_specs=pl.BlockSpec((TM, HW), lambda i: (i, 0)),
        ),
        compiler_params=pltpu.CompilerParams(
            dimension_semantics=("parallel",),
        ),
    )(x2, w2, b2)

    return out[:BC].reshape(B, C, H, W)


# --------------------------------- main ---------------------------------------

if __name__ == "__main__":
    key = jax.random.PRNGKey(0)
    k_x, k_w, k_b = jax.random.split(key, 3)

    B, C, H, W = 2, 4, 16, 16
    eps = 1e-5

    x = jax.random.normal(k_x, (B, C, H, W), dtype=jnp.float32)
    # AdaIN weight/bias are assigned externally per (batch, channel) -> (B*C,)
    weight = jax.random.normal(k_w, (B * C,), dtype=jnp.float32) * 0.5 + 1.0
    bias = jax.random.normal(k_b, (B * C,), dtype=jnp.float32) * 0.1

    y = adaptive_instance_norm_2d(x, weight, bias, eps=eps)
    jax.block_until_ready(y)

    # --- pure-JAX reference (matches F.batch_norm on x.view(1, B*C, H, W),
    #     training=True: normalize with per-(b,c) spatial batch stats) ---
    mean = x.mean(axis=(2, 3), keepdims=True)
    var = x.var(axis=(2, 3), keepdims=True)          # biased, like batch_norm
    y_ref = (x - mean) / jnp.sqrt(var + eps)
    y_ref = y_ref * weight.reshape(B, C, 1, 1) + bias.reshape(B, C, 1, 1)

    assert jnp.allclose(y, y_ref, rtol=1e-4, atol=1e-4), "mismatch vs reference"

    print("KERNEL_OK")
</pallas_src>

<mosaic_0001>
module attributes {stable_mosaic.version = 11 : i64} {
  func.func @_adain_kernel(%arg0: i32, %arg1: memref<8x256xf32, #tpu.memory_space<vmem>>, %arg2: memref<8x1xf32, #tpu.memory_space<vmem>>, %arg3: memref<8x1xf32, #tpu.memory_space<vmem>>, %arg4: memref<8x256xf32, #tpu.memory_space<vmem>>) attributes {dimension_semantics = [#tpu.dimension_semantics<parallel>], iteration_bounds = array<i64: 1>, scalar_prefetch = 0 : i64, scratch_operands = 0 : i64, tpu.core_type = #tpu.core_type<tc>, window_params = [{transform_indices = @transform_0, window_bounds = array<i64: 8, 256>}, {transform_indices = @transform_1, window_bounds = array<i64: 8, 1>}, {transform_indices = @transform_2, window_bounds = array<i64: 8, 1>}, {transform_indices = @transform_3, window_bounds = array<i64: 8, 256>}]} {
    %c0 = arith.constant 0 : index
    %c0_0 = arith.constant 0 : index
    %0 = vector.load %arg1[%c0, %c0_0] : memref<8x256xf32, #tpu.memory_space<vmem>>, vector<8x256xf32>
    %cst = arith.constant dense<0.000000e+00> : vector<8xf32>
    %1 = vector.multi_reduction <add>, %0, %cst [1] : vector<8x256xf32> to vector<8xf32>
    %2 = vector.shape_cast %1 : vector<8xf32> to vector<8x1xf32>
    %cst_1 = arith.constant 2.560000e+02 : f32
    %3 = vector.broadcast %cst_1 : f32 to vector<8x1xf32>
    %4 = arith.divf %2, %3 : vector<8x1xf32>
    %5 = vector.broadcast %4 : vector<8x1xf32> to vector<8x256xf32>
    %6 = arith.subf %0, %5 : vector<8x256xf32>
    %7 = arith.mulf %6, %6 : vector<8x256xf32>
    %cst_2 = arith.constant dense<0.000000e+00> : vector<8xf32>
    %8 = vector.multi_reduction <add>, %7, %cst_2 [1] : vector<8x256xf32> to vector<8xf32>
    %9 = vector.shape_cast %8 : vector<8xf32> to vector<8x1xf32>
    %cst_3 = arith.constant 2.560000e+02 : f32
    %10 = vector.broadcast %cst_3 : f32 to vector<8x1xf32>
    %11 = arith.divf %9, %10 : vector<8x1xf32>
    %cst_4 = arith.constant 9.99999974E-6 : f32
    %12 = vector.broadcast %cst_4 : f32 to vector<8x1xf32>
    %13 = arith.addf %11, %12 : vector<8x1xf32>
    %14 = math.rsqrt %13 : vector<8x1xf32>
    %c0_5 = arith.constant 0 : index
    %c0_6 = arith.constant 0 : index
    %15 = vector.load %arg2[%c0_5, %c0_6] : memref<8x1xf32, #tpu.memory_space<vmem>>, vector<8x1xf32>
    %16 = arith.mulf %14, %15 : vector<8x1xf32>
    %17 = vector.broadcast %16 : vector<8x1xf32> to vector<8x256xf32>
    %18 = arith.mulf %6, %17 : vector<8x256xf32>
    %c0_7 = arith.constant 0 : index
    %c0_8 = arith.constant 0 : index
    %19 = vector.load %arg3[%c0_7, %c0_8] : memref<8x1xf32, #tpu.memory_space<vmem>>, vector<8x1xf32>
    %20 = vector.broadcast %19 : vector<8x1xf32> to vector<8x256xf32>
    %21 = arith.addf %18, %20 : vector<8x256xf32>
    %c0_9 = arith.constant 0 : index
    %c0_10 = arith.constant 0 : index
    %22 = vector.load %arg4[%c0_9, %c0_10] : memref<8x256xf32, #tpu.memory_space<vmem>>, vector<8x256xf32>
    tpu.vector_store %arg4[%c0_9, %c0_10], %21 {strides = array<i32>} : memref<8x256xf32, #tpu.memory_space<vmem>>, vector<8x256xf32>,
    return
  }
  func.func @transform_0(%arg0: i32) -> (i32, i32) {
    %c0_i32 = arith.constant 0 : i32
    %c0_i32_0 = arith.constant 0 : i32
    return %arg0, %c0_i32 : i32, i32
  }
  func.func @transform_1(%arg0: i32) -> (i32, i32) {
    %c0_i32 = arith.constant 0 : i32
    %c0_i32_0 = arith.constant 0 : i32
    return %arg0, %c0_i32 : i32, i32
  }
  func.func @transform_2(%arg0: i32) -> (i32, i32) {
    %c0_i32 = arith.constant 0 : i32
    %c0_i32_0 = arith.constant 0 : i32
    return %arg0, %c0_i32 : i32, i32
  }
  func.func @transform_3(%arg0: i32) -> (i32, i32) {
    %c0_i32 = arith.constant 0 : i32
    %c0_i32_0 = arith.constant 0 : i32
    return %arg0, %c0_i32 : i32, i32
  }
}

</mosaic_0001>

<llo_original>
// kernel: tpu_custom_call.1
$region0: #{tpu_custom_call.1}
  #allocation0 [shape = 'u32[]', space=smem, size = 0x4, offset = 0x4, fixed_abs, tag = 'smem constant byte address 0x4 - core index']
  #allocation1 [shape = 'u32[144,128]{1,0:T(1,128)}', space=vmem, size = 0x12000, scoped, tag = 'internal scratch']
  %s0 = inlined_call_operand.vmem [shape: f32[8,256], index: 0, kind: input, shape index: {}]
  %s1 = inlined_call_operand.vmem [shape: f32[8,1], index: 1, kind: input, shape index: {}]
  %s2 = inlined_call_operand.vmem [shape: f32[8,1], index: 2, kind: input, shape index: {}]
  %s3 = inlined_call_operand.hbm [shape: f32[8,256], index: 3, kind: output, shape index: {}]
  %s4 = sld [smem:[#allocation0]]
  $region22: #{tpu_custom_call.1} parent=0
    _
  %s6 = ssub.s32 1, %s4
  %s7 = scalar_select 0, %s6, %s4
  $region1: #{tpu_custom_call.1} parent=0
    #allocation2 [shape = 'u8[8192]{0}', space=vmem, size = 0x2000, scoped, tag = 'output window, operand 0, single buffered']
    #allocation3 [shape = 's32[1]{0}', space=sflag, size = 0x4, scoped, tag = 'scoped memory for tpu_custom_call.1']
    %8 = vsyncpa [#allocation3], 0
    // Predicated region
    $region2: #{tpu_custom_call.1} parent=1 // pred_check
      _
    $region3: #{tpu_custom_call.1} parent=1 // pred_check_branch
      %10 = sbr.rel (0) target = $region5
    $region4: #{tpu_custom_call.1} parent=1 // pred_region
      _
    $region5: #{tpu_custom_call.1} parent=1 // pred_fallthru
      _
    // Predicated region
    $region6: #{tpu_custom_call.1} parent=1 // pred_check
      _
    $region7: #{tpu_custom_call.1} parent=1 // pred_check_branch
      %12 = sbr.rel (0) target = $region9
    $region8: #{tpu_custom_call.1} parent=1 // pred_region
      _
    $region9: #{tpu_custom_call.1} parent=1 // pred_fallthru
      _
    // Predicated region
    $region10: #{tpu_custom_call.1} parent=1 // pred_check
      _
    $region11: #{tpu_custom_call.1} parent=1 // pred_check_branch
      %14 = sbr.rel (0) target = $region13
    $region12: #{tpu_custom_call.1} parent=1 // pred_region
      _
    $region13: #{tpu_custom_call.1} parent=1 // pred_fallthru
      _
    %v15 = vld [vmem:[%s0] sm:$0xff]
    %v16 = vld [vmem:[%s0 + $0x8] sm:$0xff]
    %v17 = vadd.f32 %v15, %v16
    %18 = vadd.xlane.f32.xlu0 %v17
    %v19 = vpop.xlane.xlu0 %18
    %v20 = vrcp.pop 256.0
    %v21 = vmul.f32 %v19, %v20
    %v22 = vsub.f32 %v15, %v21
    %v23 = vsub.f32 %v16, %v21
    %v24 = vmul.f32 %v22, %v22
    %v25 = vmul.f32 %v23, %v23
    %v26 = vadd.f32 %v24, %v25
    %27 = vadd.xlane.f32.xlu0 %v26
    %v28 = vpop.xlane.xlu0 %27
    %v29 = vmul.f32 %v28, %v20
    %v30 = vadd.f32 %v29, 1e-05
    %v31 = vrsqrt.pop %v30
    %v32 = vld [vmem:[%s1] sm:$0xff]
    %v33 = vmul.f32 %v31, %v32
    %35 = vset.pattern.permute.xlu0 0
    %36 = vperm.xlu0 %35, %v33
    %v37 = vpop.permute.xlu0 %36
    %v39 = vmul.f32 %v22, %v37
    %v40 = vmul.f32 %v23, %v37
    %v41 = vld [vmem:[%s2] sm:$0xff]
    %43 = vset.pattern.permute.xlu0 0
    %44 = vperm.xlu0 %43, %v41
    %v45 = vpop.permute.xlu0 %44
    %v47 = vadd.f32 %v39, %v45
    %v48 = vadd.f32 %v40, %v45
    %49 = vst [vmem:[#allocation2] sm:$0xff] %v47
    %50 = vst [vmem:[#allocation2 + $0x8] sm:$0xff] %v48
    // Predicated region
    $region14: #{tpu_custom_call.1} parent=1 // pred_check
      _
    $region15: #{tpu_custom_call.1} parent=1 // pred_check_branch
      %52 = sbr.rel (0) target = $region17
    $region16: #{tpu_custom_call.1} parent=1 // pred_region
      %s54 = ssub.s32 256, 256
      %55 = vsyncadd [#allocation3], %s54
      %s57 = sshll.u32 [#allocation2], 4
      %s58 = int_to_ptr.vmem [resolvable:$true] %s57
      %60 = dma.vmem_to_hbm [thread:$0]  %s58, 256, %s3, [#allocation3]
    $region17: #{tpu_custom_call.1} parent=1 // pred_fallthru
      _
    // Predicated region
    $region18: #{tpu_custom_call.1} parent=1 // pred_check
      _
    $region19: #{tpu_custom_call.1} parent=1 // pred_check_branch
      %62 = sbr.rel (0) target = $region21
    $region20: #{tpu_custom_call.1} parent=1 // pred_region
      %63 = dma.done [#allocation3], 256
    $region21: #{tpu_custom_call.1} parent=1 // pred_fallthru
      _
    %64 = vsyncpa [#allocation3], 1

</llo_original>
